<compile_context>
chip_gen: v5e
topology: v5e:2x2
jax: 0.10.0
libtpu: 0.0.40
codegen_flags: <defaults>
</compile_context>

<pallas_src>
import functools

import numpy as np
import jax
import jax.numpy as jnp
from jax.experimental import pallas as pl
from jax.experimental.pallas import tpu as pltpu


def _to_2tuple(k):
    if isinstance(k, (tuple, list)):
        assert len(k) == 2
        return int(k[0]), int(k[1])
    return int(k), int(k)


def _sort2(a, b):
    return jnp.minimum(a, b), jnp.maximum(a, b)


# Devillard's median-of-9 selection network: 19 compare-exchanges.
_MEDIAN9_PAIRS = (
    (1, 2), (4, 5), (7, 8),
    (0, 1), (3, 4), (6, 7),
    (1, 2), (4, 5), (7, 8),
    (0, 3), (5, 8), (4, 7),
    (3, 6), (1, 4), (2, 5),
    (4, 7), (4, 2), (6, 4),
    (4, 2),
)


def _median_of_taps(taps):
    """Elementwise median of a list of equally-shaped arrays (VPU min/max)."""
    n = len(taps)
    p = list(taps)
    if n == 9:
        for i, j in _MEDIAN9_PAIRS:
            p[i], p[j] = _sort2(p[i], p[j])
        return p[4]
    # Generic fallback: odd-even transposition sort, then take the lower
    # median (matches torch.median semantics for even counts).
    for it in range(n):
        for j in range(it % 2, n - 1, 2):
            p[j], p[j + 1] = _sort2(p[j], p[j + 1])
    return p[(n - 1) // 2]


# ----------------------------------------------------------------------------
# Pallas kernel: one (n, c) plane per grid step.
#   xp_ref: (H + kh - 1, W + kw - 1)  zero-padded plane, input dtype
#   o_ref : (H, W)                    output plane, input dtype
# ----------------------------------------------------------------------------
def _median_blur_kernel(xp_ref, o_ref, *, kh, kw, H, W, row_chunk):
    for h0 in range(0, H, row_chunk):
        hs = min(row_chunk, H - h0)
        # kh*kw contiguous (hs, W) windows of the padded plane -- no scratch,
        # no strided access, all static offsets.
        taps = [xp_ref[h0 + dh:h0 + dh + hs, dw:dw + W]
                for dh in range(kh) for dw in range(kw)]
        o_ref[h0:h0 + hs, :] = _median_of_taps(taps)


# ----------------------------------------------------------------------------
# Wrapper: NCHW in / NCHW out (same semantics as the PyTorch MedianBlur).
# ----------------------------------------------------------------------------
def median_blur(x_nchw, kernel_size):
    kh, kw = _to_2tuple(kernel_size)
    if kh % 2 == 0 or kw % 2 == 0:
        # The PyTorch module only works for odd kernel sizes (its .view
        # reshape fails otherwise).
        raise ValueError("median_blur requires odd kernel sizes.")
    ph, pw = (kh - 1) // 2, (kw - 1) // 2
    N, C, H, W = x_nchw.shape
    Hp, Wp = H + 2 * ph, W + 2 * pw

    # Channels are independent: fold (N, C) into the grid, keep W in lanes.
    x = x_nchw.reshape(N * C, H, W)
    # Zero-pad once in XLA so the kernel only needs contiguous slices.
    xp = jnp.pad(x, ((0, 0), (ph, ph), (pw, pw)))

    row_chunk = 8 if H > 8 else H

    kernel = functools.partial(
        _median_blur_kernel, kh=kh, kw=kw, H=H, W=W, row_chunk=row_chunk)

    # VMEM budget: double-buffered padded input tile + double-buffered output
    # tile, all in the input dtype.  Clamp to a range safe on every
    # generation (v7x: 64 MiB physical VMEM).
    itemsize = np.dtype(x_nchw.dtype).itemsize
    tile_bytes = 2 * (Hp * Wp + H * W) * itemsize
    vmem_limit = int(min(max(4 * tile_bytes, 16 * 1024 * 1024),
                         48 * 1024 * 1024))
    # TODO(synk): halo-tile along H (overlapping row blocks) for planes whose
    # padded tile exceeds this VMEM budget; not needed for typical image sizes.

    out = pl.pallas_call(
        kernel,
        out_shape=jax.ShapeDtypeStruct((N * C, H, W), x_nchw.dtype),
        grid_spec=pltpu.PrefetchScalarGridSpec(
            num_scalar_prefetch=0,
            grid=(N * C,),
            in_specs=[pl.BlockSpec((None, Hp, Wp), lambda i: (i, 0, 0))],
            out_specs=pl.BlockSpec((None, H, W), lambda i: (i, 0, 0)),
        ),
        compiler_params=pltpu.CompilerParams(
            dimension_semantics=("parallel",),
            vmem_limit_bytes=vmem_limit,
        ),
    )(xp)
    return out.reshape(N, C, H, W)


# ----------------------------------------------------------------------------
# Pure-JAX reference (same semantics as the PyTorch module) for verification.
# ----------------------------------------------------------------------------
def median_blur_ref(x_nchw, kernel_size):
    kh, kw = _to_2tuple(kernel_size)
    ph, pw = (kh - 1) // 2, (kw - 1) // 2
    N, C, H, W = x_nchw.shape
    xp = jnp.pad(x_nchw, ((0, 0), (0, 0), (ph, ph), (pw, pw)))
    feats = jnp.stack([xp[:, :, i:i + H, j:j + W]
                       for i in range(kh) for j in range(kw)], axis=2)
    feats = jnp.sort(feats, axis=2)
    return feats[:, :, (kh * kw - 1) // 2]


if __name__ == "__main__":
    key = jax.random.PRNGKey(0)
    x = jax.random.normal(key, (2, 4, 16, 16), dtype=jnp.float32)

    out = median_blur(x, (3, 3))
    out = jax.block_until_ready(out)

    ref = median_blur_ref(x, (3, 3))
    np.testing.assert_allclose(np.asarray(out), np.asarray(ref),
                               rtol=1e-6, atol=1e-6)
    assert out.shape == x.shape
    print("KERNEL_OK")
</pallas_src>

<mosaic_0001>
module attributes {stable_mosaic.version = 11 : i64} {
  func.func @_median_blur_kernel(%arg0: i32, %arg1: memref<1x18x18xf32, #tpu.memory_space<vmem>>, %arg2: memref<1x16x16xf32, #tpu.memory_space<vmem>>) attributes {dimension_semantics = [#tpu.dimension_semantics<parallel>], iteration_bounds = array<i64: 8>, scalar_prefetch = 0 : i64, scratch_operands = 0 : i64, tpu.core_type = #tpu.core_type<tc>, window_params = [{transform_indices = @transform_0, window_bounds = array<i64: 1, 18, 18>}, {transform_indices = @transform_1, window_bounds = array<i64: 1, 16, 16>}]} {
    %c0 = arith.constant 0 : index
    %c0_0 = arith.constant 0 : index
    %c0_1 = arith.constant 0 : index
    %0 = vector.load %arg1[%c0, %c0_0, %c0_1] : memref<1x18x18xf32, #tpu.memory_space<vmem>>, vector<1x8x16xf32>
    %1 = vector.shape_cast %0 : vector<1x8x16xf32> to vector<8x16xf32>
    %c0_2 = arith.constant 0 : index
    %c0_3 = arith.constant 0 : index
    %c1 = arith.constant 1 : index
    %2 = vector.load %arg1[%c0_2, %c0_3, %c1] : memref<1x18x18xf32, #tpu.memory_space<vmem>>, vector<1x8x16xf32>
    %3 = vector.shape_cast %2 : vector<1x8x16xf32> to vector<8x16xf32>
    %c0_4 = arith.constant 0 : index
    %c0_5 = arith.constant 0 : index
    %c2 = arith.constant 2 : index
    %4 = vector.load %arg1[%c0_4, %c0_5, %c2] : memref<1x18x18xf32, #tpu.memory_space<vmem>>, vector<1x8x16xf32>
    %5 = vector.shape_cast %4 : vector<1x8x16xf32> to vector<8x16xf32>
    %c0_6 = arith.constant 0 : index
    %c1_7 = arith.constant 1 : index
    %c0_8 = arith.constant 0 : index
    %6 = vector.load %arg1[%c0_6, %c1_7, %c0_8] : memref<1x18x18xf32, #tpu.memory_space<vmem>>, vector<1x8x16xf32>
    %7 = vector.shape_cast %6 : vector<1x8x16xf32> to vector<8x16xf32>
    %c0_9 = arith.constant 0 : index
    %c1_10 = arith.constant 1 : index
    %c1_11 = arith.constant 1 : index
    %8 = vector.load %arg1[%c0_9, %c1_10, %c1_11] : memref<1x18x18xf32, #tpu.memory_space<vmem>>, vector<1x8x16xf32>
    %9 = vector.shape_cast %8 : vector<1x8x16xf32> to vector<8x16xf32>
    %c0_12 = arith.constant 0 : index
    %c1_13 = arith.constant 1 : index
    %c2_14 = arith.constant 2 : index
    %10 = vector.load %arg1[%c0_12, %c1_13, %c2_14] : memref<1x18x18xf32, #tpu.memory_space<vmem>>, vector<1x8x16xf32>
    %11 = vector.shape_cast %10 : vector<1x8x16xf32> to vector<8x16xf32>
    %c0_15 = arith.constant 0 : index
    %c2_16 = arith.constant 2 : index
    %c0_17 = arith.constant 0 : index
    %12 = vector.load %arg1[%c0_15, %c2_16, %c0_17] : memref<1x18x18xf32, #tpu.memory_space<vmem>>, vector<1x8x16xf32>
    %13 = vector.shape_cast %12 : vector<1x8x16xf32> to vector<8x16xf32>
    %c0_18 = arith.constant 0 : index
    %c2_19 = arith.constant 2 : index
    %c1_20 = arith.constant 1 : index
    %14 = vector.load %arg1[%c0_18, %c2_19, %c1_20] : memref<1x18x18xf32, #tpu.memory_space<vmem>>, vector<1x8x16xf32>
    %15 = vector.shape_cast %14 : vector<1x8x16xf32> to vector<8x16xf32>
    %c0_21 = arith.constant 0 : index
    %c2_22 = arith.constant 2 : index
    %c2_23 = arith.constant 2 : index
    %16 = vector.load %arg1[%c0_21, %c2_22, %c2_23] : memref<1x18x18xf32, #tpu.memory_space<vmem>>, vector<1x8x16xf32>
    %17 = vector.shape_cast %16 : vector<1x8x16xf32> to vector<8x16xf32>
    %18 = arith.minimumf %3, %5 : vector<8x16xf32>
    %19 = arith.maximumf %3, %5 : vector<8x16xf32>
    %20 = arith.minimumf %9, %11 : vector<8x16xf32>
    %21 = arith.maximumf %9, %11 : vector<8x16xf32>
    %22 = arith.minimumf %15, %17 : vector<8x16xf32>
    %23 = arith.maximumf %15, %17 : vector<8x16xf32>
    %24 = arith.minimumf %1, %18 : vector<8x16xf32>
    %25 = arith.maximumf %1, %18 : vector<8x16xf32>
    %26 = arith.minimumf %7, %20 : vector<8x16xf32>
    %27 = arith.maximumf %7, %20 : vector<8x16xf32>
    %28 = arith.minimumf %13, %22 : vector<8x16xf32>
    %29 = arith.maximumf %13, %22 : vector<8x16xf32>
    %30 = arith.minimumf %25, %19 : vector<8x16xf32>
    %31 = arith.maximumf %25, %19 : vector<8x16xf32>
    %32 = arith.minimumf %27, %21 : vector<8x16xf32>
    %33 = arith.maximumf %27, %21 : vector<8x16xf32>
    %34 = arith.minimumf %29, %23 : vector<8x16xf32>
    %35 = arith.maximumf %29, %23 : vector<8x16xf32>
    %36 = arith.maximumf %24, %26 : vector<8x16xf32>
    %37 = arith.minimumf %33, %35 : vector<8x16xf32>
    %38 = arith.minimumf %32, %34 : vector<8x16xf32>
    %39 = arith.maximumf %32, %34 : vector<8x16xf32>
    %40 = arith.maximumf %36, %28 : vector<8x16xf32>
    %41 = arith.maximumf %30, %38 : vector<8x16xf32>
    %42 = arith.minimumf %31, %37 : vector<8x16xf32>
    %43 = arith.minimumf %41, %39 : vector<8x16xf32>
    %44 = arith.minimumf %43, %42 : vector<8x16xf32>
    %45 = arith.maximumf %43, %42 : vector<8x16xf32>
    %46 = arith.maximumf %40, %44 : vector<8x16xf32>
    %47 = arith.minimumf %46, %45 : vector<8x16xf32>
    %c0_24 = arith.constant 0 : index
    %c0_25 = arith.constant 0 : index
    %c0_26 = arith.constant 0 : index
    %48 = vector.load %arg2[%c0_24, %c0_25, %c0_26] : memref<1x16x16xf32, #tpu.memory_space<vmem>>, vector<1x8x16xf32>
    %49 = vector.shape_cast %48 : vector<1x8x16xf32> to vector<8x16xf32>
    %50 = vector.shape_cast %47 : vector<8x16xf32> to vector<1x8x16xf32>
    tpu.vector_store %arg2[%c0_24, %c0_25, %c0_26], %50 {strides = array<i32>} : memref<1x16x16xf32, #tpu.memory_space<vmem>>, vector<1x8x16xf32>,
    %c0_27 = arith.constant 0 : index
    %c8 = arith.constant 8 : index
    %c0_28 = arith.constant 0 : index
    %51 = vector.load %arg1[%c0_27, %c8, %c0_28] : memref<1x18x18xf32, #tpu.memory_space<vmem>>, vector<1x8x16xf32>
    %52 = vector.shape_cast %51 : vector<1x8x16xf32> to vector<8x16xf32>
    %c0_29 = arith.constant 0 : index
    %c8_30 = arith.constant 8 : index
    %c1_31 = arith.constant 1 : index
    %53 = vector.load %arg1[%c0_29, %c8_30, %c1_31] : memref<1x18x18xf32, #tpu.memory_space<vmem>>, vector<1x8x16xf32>
    %54 = vector.shape_cast %53 : vector<1x8x16xf32> to vector<8x16xf32>
    %c0_32 = arith.constant 0 : index
    %c8_33 = arith.constant 8 : index
    %c2_34 = arith.constant 2 : index
    %55 = vector.load %arg1[%c0_32, %c8_33, %c2_34] : memref<1x18x18xf32, #tpu.memory_space<vmem>>, vector<1x8x16xf32>
    %56 = vector.shape_cast %55 : vector<1x8x16xf32> to vector<8x16xf32>
    %c0_35 = arith.constant 0 : index
    %c9 = arith.constant 9 : index
    %c0_36 = arith.constant 0 : index
    %57 = vector.load %arg1[%c0_35, %c9, %c0_36] : memref<1x18x18xf32, #tpu.memory_space<vmem>>, vector<1x8x16xf32>
    %58 = vector.shape_cast %57 : vector<1x8x16xf32> to vector<8x16xf32>
    %c0_37 = arith.constant 0 : index
    %c9_38 = arith.constant 9 : index
    %c1_39 = arith.constant 1 : index
    %59 = vector.load %arg1[%c0_37, %c9_38, %c1_39] : memref<1x18x18xf32, #tpu.memory_space<vmem>>, vector<1x8x16xf32>
    %60 = vector.shape_cast %59 : vector<1x8x16xf32> to vector<8x16xf32>
    %c0_40 = arith.constant 0 : index
    %c9_41 = arith.constant 9 : index
    %c2_42 = arith.constant 2 : index
    %61 = vector.load %arg1[%c0_40, %c9_41, %c2_42] : memref<1x18x18xf32, #tpu.memory_space<vmem>>, vector<1x8x16xf32>
    %62 = vector.shape_cast %61 : vector<1x8x16xf32> to vector<8x16xf32>
    %c0_43 = arith.constant 0 : index
    %c10 = arith.constant 10 : index
    %c0_44 = arith.constant 0 : index
    %63 = vector.load %arg1[%c0_43, %c10, %c0_44] : memref<1x18x18xf32, #tpu.memory_space<vmem>>, vector<1x8x16xf32>
    %64 = vector.shape_cast %63 : vector<1x8x16xf32> to vector<8x16xf32>
    %c0_45 = arith.constant 0 : index
    %c10_46 = arith.constant 10 : index
    %c1_47 = arith.constant 1 : index
    %65 = vector.load %arg1[%c0_45, %c10_46, %c1_47] : memref<1x18x18xf32, #tpu.memory_space<vmem>>, vector<1x8x16xf32>
    %66 = vector.shape_cast %65 : vector<1x8x16xf32> to vector<8x16xf32>
    %c0_48 = arith.constant 0 : index
    %c10_49 = arith.constant 10 : index
    %c2_50 = arith.constant 2 : index
    %67 = vector.load %arg1[%c0_48, %c10_49, %c2_50] : memref<1x18x18xf32, #tpu.memory_space<vmem>>, vector<1x8x16xf32>
    %68 = vector.shape_cast %67 : vector<1x8x16xf32> to vector<8x16xf32>
    %69 = arith.minimumf %54, %56 : vector<8x16xf32>
    %70 = arith.maximumf %54, %56 : vector<8x16xf32>
    %71 = arith.minimumf %60, %62 : vector<8x16xf32>
    %72 = arith.maximumf %60, %62 : vector<8x16xf32>
    %73 = arith.minimumf %66, %68 : vector<8x16xf32>
    %74 = arith.maximumf %66, %68 : vector<8x16xf32>
    %75 = arith.minimumf %52, %69 : vector<8x16xf32>
    %76 = arith.maximumf %52, %69 : vector<8x16xf32>
    %77 = arith.minimumf %58, %71 : vector<8x16xf32>
    %78 = arith.maximumf %58, %71 : vector<8x16xf32>
    %79 = arith.minimumf %64, %73 : vector<8x16xf32>
    %80 = arith.maximumf %64, %73 : vector<8x16xf32>
    %81 = arith.minimumf %76, %70 : vector<8x16xf32>
    %82 = arith.maximumf %76, %70 : vector<8x16xf32>
    %83 = arith.minimumf %78, %72 : vector<8x16xf32>
    %84 = arith.maximumf %78, %72 : vector<8x16xf32>
    %85 = arith.minimumf %80, %74 : vector<8x16xf32>
    %86 = arith.maximumf %80, %74 : vector<8x16xf32>
    %87 = arith.maximumf %75, %77 : vector<8x16xf32>
    %88 = arith.minimumf %84, %86 : vector<8x16xf32>
    %89 = arith.minimumf %83, %85 : vector<8x16xf32>
    %90 = arith.maximumf %83, %85 : vector<8x16xf32>
    %91 = arith.maximumf %87, %79 : vector<8x16xf32>
    %92 = arith.maximumf %81, %89 : vector<8x16xf32>
    %93 = arith.minimumf %82, %88 : vector<8x16xf32>
    %94 = arith.minimumf %92, %90 : vector<8x16xf32>
    %95 = arith.minimumf %94, %93 : vector<8x16xf32>
    %96 = arith.maximumf %94, %93 : vector<8x16xf32>
    %97 = arith.maximumf %91, %95 : vector<8x16xf32>
    %98 = arith.minimumf %97, %96 : vector<8x16xf32>
    %c0_51 = arith.constant 0 : index
    %c8_52 = arith.constant 8 : index
    %c0_53 = arith.constant 0 : index
    %99 = vector.load %arg2[%c0_51, %c8_52, %c0_53] : memref<1x16x16xf32, #tpu.memory_space<vmem>>, vector<1x8x16xf32>
    %100 = vector.shape_cast %99 : vector<1x8x16xf32> to vector<8x16xf32>
    %101 = vector.shape_cast %98 : vector<8x16xf32> to vector<1x8x16xf32>
    tpu.vector_store %arg2[%c0_51, %c8_52, %c0_53], %101 {strides = array<i32>} : memref<1x16x16xf32, #tpu.memory_space<vmem>>, vector<1x8x16xf32>,
    return
  }
  func.func @transform_0(%arg0: i32) -> (i32, i32, i32) {
    %c0_i32 = arith.constant 0 : i32
    %c0_i32_0 = arith.constant 0 : i32
    %c0_i32_1 = arith.constant 0 : i32
    return %arg0, %c0_i32, %c0_i32_0 : i32, i32, i32
  }
  func.func @transform_1(%arg0: i32) -> (i32, i32, i32) {
    %c0_i32 = arith.constant 0 : i32
    %c0_i32_0 = arith.constant 0 : i32
    %c0_i32_1 = arith.constant 0 : i32
    return %arg0, %c0_i32, %c0_i32_0 : i32, i32, i32
  }
}

</mosaic_0001>

<llo_original>
// kernel: tpu_custom_call.1
$region0: #{tpu_custom_call.1}
  #allocation0 [shape = 'u32[]', space=smem, size = 0x4, offset = 0x4, fixed_abs, tag = 'smem constant byte address 0x4 - core index']
  #allocation1 [shape = 'u32[72,128]{1,0:T(1,128)}', space=vmem, size = 0x9000, scoped, tag = 'internal scratch']
  %s0 = inlined_call_operand.vmem [shape: f32[8,18,18], index: 0, kind: input, shape index: {}]
  %s1 = inlined_call_operand.hbm [shape: f32[8,16,16], index: 1, kind: output, shape index: {}]
  %s2 = sld [smem:[#allocation0]]
  $region37: #{tpu_custom_call.1} parent=0
    _
  %s4 = ssub.s32 1, %s2
  %s5 = scalar_select 0, %s4, %s2
  $region1: #{tpu_custom_call.1} parent=0
    #allocation2 [shape = 'u8[16384]{0}', space=vmem, size = 0x4000, scoped, tag = 'output window, operand 0']
    #allocation3 [shape = 's32[2]{0}', space=sflag, size = 0x8, scoped, tag = 'scoped memory for tpu_custom_call.1']
    %6 = vsyncpa [#allocation3], 0
    %s7 = scalar_lea.sflag [#allocation3], 1
    %8 = vsyncpa %s7, 0
    loop: start=0, step=1, limit=10
    $region2: #{tpu_custom_call.1} parent=1 // loop_pre_header
      _
    $region3: #{tpu_custom_call.1} parent=1 // loop_header
      %s10 = sphi 0, %s14
      %p11 = scmp.ge.s32.totalorder %s10, 10
      %s20 = sphi 0, %s22
      %s23 = sphi 0, %s20
      %s24 = sphi 0, %s23
      %s40 = sphi 0, %s24
      %s46 = sphi 0, %s48
      %s49 = sphi 0, %s46
      %s50 = sphi 0, %s49
      %s66 = sphi 0, %s50
    $region4: #{tpu_custom_call.1} parent=1 // loop_header_branch
      %13 = sbr.rel (%p11) target = $region8
    $region5: #{tpu_custom_call.1} parent=1 // loop_body
      %s15 = ssub.s32 %s10, 1
      %s16 = ssub.s32 %s10, 2
      %s17 = sadd.s32 %s10, 1
      %s18 = ssub.s32 %s10, %s17
      %p19 = scmp.eq.s32.totalorder %s18, 0
      %s21 = sadd.s32 %s20, 1
      %s22 = scalar_select %p19, %s20, %s21
      %p25 = pneg %p19
      %p26 = scmp.eq.s32.totalorder %s10, 7
      %p27 = por %p25, %p26
      %p28 = scmp.ne.s32.totalorder %s20, %s23
      %p29 = scmp.eq.s32.totalorder %s10, 0
      %p30 = por %p28, %p29
      %p31 = scmp.ne.s32.totalorder %s20, %s23
      %p32 = scmp.eq.s32.totalorder %s15, 7
      %p33 = por %p31, %p32
      %p34 = scmp.ne.s32.totalorder %s23, %s24
      %p35 = scmp.eq.s32.totalorder %s15, 0
      %p36 = por %p34, %p35
      %p37 = scmp.ne.s32.totalorder %s23, %s24
      %p38 = scmp.eq.s32.totalorder %s16, 7
      %p39 = por %p37, %p38
      %p41 = scmp.ne.s32.totalorder %s24, %s40
      %p42 = scmp.eq.s32.totalorder %s16, 0
      %p43 = por %p41, %p42
      %s44 = ssub.s32 %s10, %s17
      %p45 = scmp.eq.s32.totalorder %s44, 0
      %s47 = sadd.s32 %s46, 1
      %s48 = scalar_select %p45, %s46, %s47
      %p51 = pneg %p45
      %p52 = scmp.eq.s32.totalorder %s10, 7
      %p53 = por %p51, %p52
      %p54 = scmp.ne.s32.totalorder %s46, %s49
      %p55 = scmp.eq.s32.totalorder %s10, 0
      %p56 = por %p54, %p55
      %p57 = scmp.ne.s32.totalorder %s46, %s49
      %p58 = scmp.eq.s32.totalorder %s15, 7
      %p59 = por %p57, %p58
      %p60 = scmp.ne.s32.totalorder %s49, %s50
      %p61 = scmp.eq.s32.totalorder %s15, 0
      %p62 = por %p60, %p61
      %p63 = scmp.ne.s32.totalorder %s49, %s50
      %p64 = scmp.eq.s32.totalorder %s16, 7
      %p65 = por %p63, %p64
      %p67 = scmp.ne.s32.totalorder %s50, %s66
      %p68 = scmp.eq.s32.totalorder %s16, 0
      %p69 = por %p67, %p68
      %p70 = scmp.le.s32.totalorder 1, %s10
      %p71 = scmp.lt.s32.totalorder %s10, 9
      %p72 = pnand %p70, %p71
      %p73 = pneg %p72
      // Predicated region
      $region9: #{tpu_custom_call.1} parent=5 // pred_check
        _
      $region10: #{tpu_custom_call.1} parent=5 // pred_check_branch
        %75 = sbr.rel (%p72) target = $region12
      $region11: #{tpu_custom_call.1} parent=5 // pred_region
        %s76 = ssub.s32 %s10, 1
      $region12: #{tpu_custom_call.1} parent=5 // pred_fallthru
        _
      %p77 = scmp.lt.s32.totalorder %s10, 8
      // Predicated region
      $region13: #{tpu_custom_call.1} parent=5 // pred_check
        %p78 = pneg %p77
      $region14: #{tpu_custom_call.1} parent=5 // pred_check_branch
        %80 = sbr.rel (%p78) target = $region16
      $region15: #{tpu_custom_call.1} parent=5 // pred_region
        // Predicated region
        $region17: #{tpu_custom_call.1} parent=15 // pred_check
          %p81 = pneg %p30
        $region18: #{tpu_custom_call.1} parent=15 // pred_check_branch
          %83 = sbr.rel (%p81) target = $region20
        $region19: #{tpu_custom_call.1} parent=15 // pred_region
          %p84 = scmp.lt.s32.totalorder %s10, 7
          %s85 = scalar_select %p84, %s10, 7
          %s86 = smul.addr %s85, 3
          %s87 = smul.addr %s86, 8
          %s88 = scalar_lea.vmem %s0, %s87
        $region20: #{tpu_custom_call.1} parent=15 // pred_fallthru
          _
      $region16: #{tpu_custom_call.1} parent=5 // pred_fallthru
        _
      %p89 = scmp.le.s32.totalorder 1, %s10
      %p90 = scmp.lt.s32.totalorder %s10, 9
      %p91 = pnand %p89, %p90
      %p92 = pneg %p91
      // Predicated region
      $region21: #{tpu_custom_call.1} parent=5 // pred_check
        _
      $region22: #{tpu_custom_call.1} parent=5 // pred_check_branch
        %94 = sbr.rel (%p91) target = $region24
      $region23: #{tpu_custom_call.1} parent=5 // pred_region
        %s95 = ssub.s32 %s10, 1
        %p96 = scmp.lt.s32.totalorder %s15, 7
        %s97 = scalar_select %p96, %s15, 7
        %s98 = smul.addr %s97, 3
        %s99 = smul.addr %s98, 8
        %s100 = scalar_lea.vmem %s0, %s99
        %p101 = pneg %p36
        %p102 = pneg %p33
        %p103 = pneg %p62
        %p104 = pneg %p59
        %s105 = sand.u32 %s49, 1
        %s106 = scalar_lea.sflag [#allocation3], %s105
        %s107 = sand.u32 %s49, 1
        %s108 = smul.addr %s107, 16
        %s109 = scalar_lea.vmem [#allocation2], %s108
        %p110 = scmp.lt.s32.totalorder %s15, 7
        %s111 = scalar_select %p110, %s15, 7
        %s112 = smul.addr %s111, 3
        %s113 = smul.addr %s112, 8
        %s114 = scalar_lea.vmem %s0, %s113
        %v115 = vld [vmem:[%s114] sm:$0xff]
        %v116 = vld [vmem:[%s114 + $0x1] sm:$0xff]
        %v117 = vld [vmem:[%s114 + $0x2] sm:$0xff]
        %119 = vrot.lane.b32.xlu0 %v115, 127
        %v120 = vpop.permute.xlu0 %119
        %v122 = vmin.f32 %v115, %v120
        %v123 = vmax.f32 %v115, %v120
        %125 = vrot.lane.b32.xlu0 %v116, 127
        %v126 = vpop.permute.xlu0 %125
        %v128 = vmin.f32 %v116, %v126
        %v129 = vmax.f32 %v116, %v126
        %131 = vrot.lane.b32.xlu0 %v117, 127
        %v132 = vpop.permute.xlu0 %131
        %v134 = vmin.f32 %v117, %v132
        %v135 = vmax.f32 %v117, %v132
        %137 = vrot.lane.b32.xlu0 %v122, 127
        %v138 = vpop.permute.xlu0 %137
        %v140 = vmin.f32 %v115, %v138
        %v141 = vmax.f32 %v115, %v138
        %143 = vrot.lane.b32.xlu0 %v128, 127
        %v144 = vpop.permute.xlu0 %143
        %v146 = vmin.f32 %v116, %v144
        %v147 = vmax.f32 %v116, %v144
        %149 = vrot.lane.b32.xlu0 %v134, 127
        %v150 = vpop.permute.xlu0 %149
        %v152 = vmin.f32 %v117, %v150
        %v153 = vmax.f32 %v117, %v150
        %155 = vrot.lane.b32.xlu0 %v123, 127
        %v156 = vpop.permute.xlu0 %155
        %v158 = vmin.f32 %v141, %v156
        %v159 = vmax.f32 %v141, %v156
        %161 = vrot.lane.b32.xlu0 %v129, 127
        %v162 = vpop.permute.xlu0 %161
        %v164 = vmin.f32 %v147, %v162
        %v165 = vmax.f32 %v147, %v162
        %167 = vrot.lane.b32.xlu0 %v135, 127
        %v168 = vpop.permute.xlu0 %167
        %v170 = vmin.f32 %v153, %v168
        %v171 = vmax.f32 %v153, %v168
        %v172 = vmax.f32 %v140, %v146
        %v173 = vmin.f32 %v165, %v171
        %v174 = vmin.f32 %v164, %v170
        %v175 = vmax.f32 %v164, %v170
        %v176 = vmax.f32 %v172, %v152
        %v177 = vmax.f32 %v158, %v174
        %v178 = vmin.f32 %v159, %v173
        %v179 = vmin.f32 %v177, %v175
        %v180 = vmin.f32 %v179, %v178
        %v181 = vmax.f32 %v179, %v178
        %v182 = vmax.f32 %v176, %v180
        %v183 = vmin.f32 %v182, %v181
        %vm184 = vcmask 130048
        %185 = vst.msk [vmem:[%s109] sm:$0xff] %vm184, %v183
        %v186 = vld [vmem:[%s114 + $0x8] sm:$0xff]
        %v187 = vld [vmem:[%s114 + $0x9] sm:$0xff]
        %v188 = vld [vmem:[%s114 + $0xa] sm:$0xff]
        %190 = vrot.lane.b32.xlu0 %v186, 127
        %v191 = vpop.permute.xlu0 %190
        %v193 = vmin.f32 %v186, %v191
        %v194 = vmax.f32 %v186, %v191
        %196 = vrot.lane.b32.xlu0 %v187, 127
        %v197 = vpop.permute.xlu0 %196
        %v199 = vmin.f32 %v187, %v197
        %v200 = vmax.f32 %v187, %v197
        %202 = vrot.lane.b32.xlu0 %v188, 127
        %v203 = vpop.permute.xlu0 %202
        %v205 = vmin.f32 %v188, %v203
        %v206 = vmax.f32 %v188, %v203
        %208 = vrot.lane.b32.xlu0 %v193, 127
        %v209 = vpop.permute.xlu0 %208
        %v211 = vmin.f32 %v186, %v209
        %v212 = vmax.f32 %v186, %v209
        %214 = vrot.lane.b32.xlu0 %v199, 127
        %v215 = vpop.permute.xlu0 %214
        %v217 = vmin.f32 %v187, %v215
        %v218 = vmax.f32 %v187, %v215
        %220 = vrot.lane.b32.xlu0 %v205, 127
        %v221 = vpop.permute.xlu0 %220
        %v223 = vmin.f32 %v188, %v221
        %v224 = vmax.f32 %v188, %v221
        %226 = vrot.lane.b32.xlu0 %v194, 127
        %v227 = vpop.permute.xlu0 %226
        %v229 = vmin.f32 %v212, %v227
        %v230 = vmax.f32 %v212, %v227
        %232 = vrot.lane.b32.xlu0 %v200, 127
        %v233 = vpop.permute.xlu0 %232
        %v235 = vmin.f32 %v218, %v233
        %v236 = vmax.f32 %v218, %v233
        %238 = vrot.lane.b32.xlu0 %v206, 127
        %v239 = vpop.permute.xlu0 %238
        %v241 = vmin.f32 %v224, %v239
        %v242 = vmax.f32 %v224, %v239
        %v243 = vmax.f32 %v211, %v217
        %v244 = vmin.f32 %v236, %v242
        %v245 = vmin.f32 %v235, %v241
        %v246 = vmax.f32 %v235, %v241
        %v247 = vmax.f32 %v243, %v223
        %v248 = vmax.f32 %v229, %v245
        %v249 = vmin.f32 %v230, %v244
        %v250 = vmin.f32 %v248, %v246
        %v251 = vmin.f32 %v250, %v249
        %v252 = vmax.f32 %v250, %v249
        %v253 = vmax.f32 %v247, %v251
        %v254 = vmin.f32 %v253, %v252
        %255 = vst.msk [vmem:[%s109 + $0x8] sm:$0xff] %vm184, %v254
        %s256 = sand.u32 %s49, 1
        %s257 = scalar_lea.sflag [#allocation3], %s256
        %s258 = sand.u32 %s49, 1
        %s259 = smul.addr %s258, 16
        %s260 = scalar_lea.vmem [#allocation2], %s259
        // Predicated region
        $region25: #{tpu_custom_call.1} parent=23 // pred_check
          %p261 = pneg %p59
        $region26: #{tpu_custom_call.1} parent=23 // pred_check_branch
          %263 = sbr.rel (%p261) target = $region28
        $region27: #{tpu_custom_call.1} parent=23 // pred_region
          %265 = vsyncadd %s257, 0
          %s266 = smul.addr %s15, 2
          %s267 = smul.addr %s266, 8
          %s268 = scalar_lea.hbm %s1, %s267
          %s269 = sshll.u32 %s260, 4
          %s270 = int_to_ptr.vmem [resolvable:$true] %s269
          %s271 = sshll.u32 %s268, 4
          %s272 = int_to_ptr.hbm [resolvable:$true] %s271
          %277 = dma.vmem_to_hbm [thread:$0]  %s270, 256, %s272, %s257, 128, 128, 8
        $region28: #{tpu_custom_call.1} parent=23 // pred_fallthru
          _
      $region24: #{tpu_custom_call.1} parent=5 // pred_fallthru
        _
      %p278 = scmp.le.s32.totalorder 2, %s10
      // Predicated region
      $region29: #{tpu_custom_call.1} parent=5 // pred_check
        %p279 = pneg %p278
      $region30: #{tpu_custom_call.1} parent=5 // pred_check_branch
        %281 = sbr.rel (%p279) target = $region32
      $region31: #{tpu_custom_call.1} parent=5 // pred_region
        %s282 = ssub.s32 %s10, 2
        // Predicated region
        $region33: #{tpu_custom_call.1} parent=31 // pred_check
          %p283 = pneg %p65
        $region34: #{tpu_custom_call.1} parent=31 // pred_check_branch
          %285 = sbr.rel (%p283) target = $region36
        $region35: #{tpu_custom_call.1} parent=31 // pred_region
          %s286 = sand.u32 %s50, 1
          %s287 = scalar_lea.sflag [#allocation3], %s286
          %s288 = sand.u32 %s50, 1
          %s289 = smul.addr %s288, 16
          %s290 = scalar_lea.vmem [#allocation2], %s289
          %292 = dma.done %s287, 256
        $region36: #{tpu_custom_call.1} parent=31 // pred_fallthru
          _
      $region32: #{tpu_custom_call.1} parent=5 // pred_fallthru
        _
    $region6: #{tpu_custom_call.1} parent=1 // loop_footer
      %s14 = sadd.s32 1, %s10
    $region7: #{tpu_custom_call.1} parent=1 // loop_footer_branch
      %9 = sbr.rel target = $region3
    $region8: #{tpu_custom_call.1} parent=1 // loop_exit
      _
    %293 = vsyncpa [#allocation3], 1
    %s294 = scalar_lea.sflag [#allocation3], 1
    %295 = vsyncpa %s294, 1

</llo_original>
